<compile_context>
chip_gen: v5e
topology: v5e:2x2
jax: 0.10.0
libtpu: 0.0.40
codegen_flags: <defaults>
</compile_context>

<pallas_src>
import jax
import jax.numpy as jnp
from jax import lax
from jax.experimental import pallas as pl
from jax.experimental.pallas import tpu as pltpu


# ------------------------------ Pallas kernel ------------------------------ #

def _fused_basic_block_kernel(x_ref, a1_ref, b1_ref, a2_ref, b2_ref, out_ref,
                              xpad_sc, mid_sc):
    """One grid step = one image.

    x_ref   : (1, H, W*C)      input activation, compute dtype, lane-dense
    a1_ref  : (3, W*C, W*C)    conv1 block-banded weights (bn1 scale folded)
    b1_ref  : (1, W*C)         bn1 bias tiled along W, f32
    a2_ref  : (3, W*C, W*C)    conv2 block-banded weights (bn2 scale folded)
    b2_ref  : (1, W*C)         bn2 bias tiled along W, f32
    out_ref : (1, H, W*C)      f32 output
    xpad_sc : (H+2, W*C)       VMEM scratch: x with 1-row zero halo top/bottom
    mid_sc  : (H+2, W*C)       VMEM scratch: conv1 output with zero halo rows
    """
    H, WC = x_ref.shape[1], x_ref.shape[2]

    # Zero only the vertical halo rows.  Re-zeroed every step (cheap: 4 row
    # stores) so correctness does not depend on how the grid is sharded across
    # TensorCores — scratch is per-core and not guaranteed initialized.
    zrow = jnp.zeros((1, WC), xpad_sc.dtype)
    xpad_sc[0:1, :] = zrow
    xpad_sc[H + 1:H + 2, :] = zrow
    mid_sc[0:1, :] = zrow
    mid_sc[H + 1:H + 2, :] = zrow

    # Single HBM read of x lands in the interior of the padded scratch.
    xpad_sc[1:H + 1, :] = x_ref[0]

    def conv3x3_banded(src_sc, a_ref):
        # 3x3 "SAME" conv as 3 row-shifted matmuls; horizontal padding is
        # encoded in the band structure of a_ref[kh].  f32 accumulation.
        acc = jnp.dot(src_sc[0:H, :], a_ref[0],
                      preferred_element_type=jnp.float32)
        acc = acc + jnp.dot(src_sc[1:H + 1, :], a_ref[1],
                            preferred_element_type=jnp.float32)
        acc = acc + jnp.dot(src_sc[2:H + 2, :], a_ref[2],
                            preferred_element_type=jnp.float32)
        return acc

    # ---- conv1 (+ folded bn1) + relu -> mid scratch interior ---------------
    y1 = jnp.maximum(conv3x3_banded(xpad_sc, a1_ref) + b1_ref[...], 0.0)
    mid_sc[1:H + 1, :] = y1.astype(mid_sc.dtype)

    # ---- conv2 (+ folded bn2) + residual add + relu -> out ------------------
    y2 = conv3x3_banded(mid_sc, a2_ref) + b2_ref[...]
    y2 = y2 + xpad_sc[1:H + 1, :].astype(jnp.float32)   # residual (no 2nd HBM read)
    out_ref[0] = jnp.maximum(y2, 0.0).astype(out_ref.dtype)


# --------------------------- banded-weight builder -------------------------- #

def _banded_weights(w_hwio, scale, W, dtype):
    """Fold BN scale into a 3x3 HWIO conv weight and expand each kh-plane into
    a block-banded (W*Cin, W*Cout) matrix so the conv becomes 3 row-shifted
    matmuls.  A_kh[(w+kw-1)*Cin + ci, w*Cout + co] = w[kh,kw,ci,co] (valid w)."""
    wf = (w_hwio * scale).astype(jnp.float32)            # (3, 3, Cin, Cout)
    Cout = w_hwio.shape[3]
    mats = []
    for kh in range(3):
        A = jnp.zeros((W * w_hwio.shape[2], W * Cout), jnp.float32)
        for kw in range(3):
            A = A + jnp.kron(jnp.eye(W, k=1 - kw, dtype=jnp.float32),
                             wf[kh, kw])
        mats.append(A)
    return jnp.stack(mats).astype(dtype)                  # (3, W*Cin, W*Cout)


# ------------------------------ Python wrappers ------------------------------ #

def basic_block_forward_nhwc(x_nhwc, params, compute_dtype=jnp.bfloat16):
    """NHWC-native fused BasicBlock forward (preferred: no layout transposes)."""
    N, H, W, C = x_nhwc.shape
    Cout = params["w1"].shape[-1]
    assert Cout == C, "stride=1 / downsample=None requires inplanes == planes"

    x_flat = x_nhwc.reshape(N, H, W * C).astype(compute_dtype)   # lane-dense slab

    a1 = _banded_weights(params["w1"], params["scale1"], W, compute_dtype)
    a2 = _banded_weights(params["w2"], params["scale2"], W, compute_dtype)
    # Tile biases along W so the epilogue stays in the lane-dense (H, W*C) layout.
    b1 = jnp.tile(params["bias1"], W)[None, :].astype(jnp.float32)
    b2 = jnp.tile(params["bias2"], W)[None, :].astype(jnp.float32)

    out_flat = pl.pallas_call(
        _fused_basic_block_kernel,
        out_shape=jax.ShapeDtypeStruct((N, H, W * Cout), jnp.float32),
        grid=(N,),
        in_specs=[
            pl.BlockSpec((1, H, W * C), lambda n: (n, 0, 0)),
            pl.BlockSpec((3, W * C, W * Cout), lambda n: (0, 0, 0)),
            pl.BlockSpec((1, W * Cout), lambda n: (0, 0)),
            pl.BlockSpec((3, W * Cout, W * Cout), lambda n: (0, 0, 0)),
            pl.BlockSpec((1, W * Cout), lambda n: (0, 0)),
        ],
        out_specs=pl.BlockSpec((1, H, W * Cout), lambda n: (n, 0, 0)),
        scratch_shapes=[
            pltpu.VMEM((H + 2, W * C), compute_dtype),     # x + zero halo rows
            pltpu.VMEM((H + 2, W * Cout), compute_dtype),  # conv1 out + halo rows
        ],
        compiler_params=pltpu.CompilerParams(
            dimension_semantics=("parallel",),
            vmem_limit_bytes=32 * 1024 * 1024),
    )(x_flat, a1, b1, a2, b2)

    return out_flat.reshape(N, H, W, Cout)


def basic_block_forward(x_nchw, params, compute_dtype=jnp.bfloat16):
    """NCHW (PyTorch-convention) wrapper.  Note: the two transposes cost a full
    HBM read+write each; keep the surrounding model NHWC and call
    basic_block_forward_nhwc directly when possible."""
    x = jnp.transpose(x_nchw, (0, 2, 3, 1)).astype(jnp.float32)   # NHWC
    out = basic_block_forward_nhwc(x, params, compute_dtype)
    return jnp.transpose(out, (0, 3, 1, 2))


# ----------------------------- reference (JAX) ------------------------------ #

def basic_block_reference(x_nchw, params):
    x = jnp.transpose(x_nchw, (0, 2, 3, 1)).astype(jnp.float32)

    def conv(inp, w):
        return lax.conv_general_dilated(
            inp, w, window_strides=(1, 1), padding="SAME",
            dimension_numbers=("NHWC", "HWIO", "NHWC"))

    o = conv(x, params["w1"]) * params["scale1"] + params["bias1"]
    o = jnp.maximum(o, 0.0)
    o = conv(o, params["w2"]) * params["scale2"] + params["bias2"]
    o = jnp.maximum(o + x, 0.0)
    return jnp.transpose(o, (0, 3, 1, 2))


# ------------------------------- param setup -------------------------------- #

def make_params(key, inplanes, planes, eps=1e-5):
    ks = jax.random.split(key, 8)
    w1 = jax.random.normal(ks[0], (3, 3, inplanes, planes), jnp.float32) * 0.1
    w2 = jax.random.normal(ks[1], (3, 3, planes, planes), jnp.float32) * 0.1
    g1 = 1.0 + 0.1 * jax.random.normal(ks[2], (planes,), jnp.float32)
    b1 = 0.1 * jax.random.normal(ks[3], (planes,), jnp.float32)
    m1 = 0.05 * jax.random.normal(ks[4], (planes,), jnp.float32)
    v1 = 1.0 + 0.1 * jnp.abs(jax.random.normal(ks[5], (planes,), jnp.float32))
    g2 = 1.0 + 0.1 * jax.random.normal(ks[6], (planes,), jnp.float32)
    b2 = 0.1 * jax.random.normal(ks[7], (planes,), jnp.float32)
    m2 = jnp.zeros((planes,), jnp.float32)
    v2 = jnp.ones((planes,), jnp.float32)

    scale1 = g1 / jnp.sqrt(v1 + eps)
    bias1 = b1 - m1 * scale1
    scale2 = g2 / jnp.sqrt(v2 + eps)
    bias2 = b2 - m2 * scale2
    return {"w1": w1, "scale1": scale1, "bias1": bias1,
            "w2": w2, "scale2": scale2, "bias2": bias2}


if __name__ == "__main__":
    key = jax.random.PRNGKey(0)
    kx, kp = jax.random.split(key)

    # inplanes = planes = 8, stride = 1; W*C = 128 -> lane-dense slabs.
    # N=8 gives >=4 pipelined grid steps per TensorCore on v7x (2 TCs).
    N, C, H, W = 8, 8, 16, 16
    x = jax.random.normal(kx, (N, C, H, W), jnp.float32)   # NCHW input
    params = make_params(kp, inplanes=C, planes=C)

    ref = basic_block_reference(x, params)

    # f32 compute path: matches the f32 reference tightly.
    out_f32 = jax.block_until_ready(basic_block_forward(x, params, jnp.float32))
    assert out_f32.shape == (N, C, H, W)
    assert jnp.allclose(out_f32, ref, atol=1e-4, rtol=1e-4), "f32 mismatch"

    # Default bf16 MXU path (f32 accumulation/epilogue): looser tolerance.
    out_bf16 = jax.block_until_ready(basic_block_forward(x, params))
    assert jnp.allclose(out_bf16, ref, atol=1e-1, rtol=1e-1), "bf16 mismatch"

    print("KERNEL_OK")
</pallas_src>

<mosaic_0001>
module attributes {stable_mosaic.version = 11 : i64} {
  func.func @_fused_basic_block_kernel(%arg0: i32, %arg1: memref<1x16x128xf32, #tpu.memory_space<vmem>>, %arg2: memref<3x128x128xf32, #tpu.memory_space<vmem>>, %arg3: memref<1x128xf32, #tpu.memory_space<vmem>>, %arg4: memref<3x128x128xf32, #tpu.memory_space<vmem>>, %arg5: memref<1x128xf32, #tpu.memory_space<vmem>>, %arg6: memref<1x16x128xf32, #tpu.memory_space<vmem>>, %arg7: memref<18x128xf32, #tpu.memory_space<vmem>>, %arg8: memref<18x128xf32, #tpu.memory_space<vmem>>) attributes {dimension_semantics = [#tpu.dimension_semantics<parallel>], iteration_bounds = array<i64: 8>, scalar_prefetch = 0 : i64, scratch_operands = 2 : i64, tpu.core_type = #tpu.core_type<tc>, window_params = [{transform_indices = @transform_0, window_bounds = array<i64: 1, 16, 128>}, {pipeline_mode = #tpu.pipeline_mode<synchronous>, transform_indices = @transform_1, window_bounds = array<i64: 3, 128, 128>}, {pipeline_mode = #tpu.pipeline_mode<synchronous>, transform_indices = @transform_2, window_bounds = array<i64: 1, 128>}, {pipeline_mode = #tpu.pipeline_mode<synchronous>, transform_indices = @transform_3, window_bounds = array<i64: 3, 128, 128>}, {pipeline_mode = #tpu.pipeline_mode<synchronous>, transform_indices = @transform_4, window_bounds = array<i64: 1, 128>}, {transform_indices = @transform_5, window_bounds = array<i64: 1, 16, 128>}]} {
    %cst = arith.constant 0.000000e+00 : f32
    %0 = vector.broadcast %cst : f32 to vector<1x128xf32>
    %c0 = arith.constant 0 : index
    %c0_0 = arith.constant 0 : index
    %1 = vector.load %arg7[%c0, %c0_0] : memref<18x128xf32, #tpu.memory_space<vmem>>, vector<1x128xf32>
    tpu.vector_store %arg7[%c0, %c0_0], %0 {strides = array<i32>} : memref<18x128xf32, #tpu.memory_space<vmem>>, vector<1x128xf32>,
    %c17 = arith.constant 17 : index
    %c0_1 = arith.constant 0 : index
    %2 = vector.load %arg7[%c17, %c0_1] : memref<18x128xf32, #tpu.memory_space<vmem>>, vector<1x128xf32>
    tpu.vector_store %arg7[%c17, %c0_1], %0 {strides = array<i32>} : memref<18x128xf32, #tpu.memory_space<vmem>>, vector<1x128xf32>,
    %c0_2 = arith.constant 0 : index
    %c0_3 = arith.constant 0 : index
    %3 = vector.load %arg8[%c0_2, %c0_3] : memref<18x128xf32, #tpu.memory_space<vmem>>, vector<1x128xf32>
    tpu.vector_store %arg8[%c0_2, %c0_3], %0 {strides = array<i32>} : memref<18x128xf32, #tpu.memory_space<vmem>>, vector<1x128xf32>,
    %c17_4 = arith.constant 17 : index
    %c0_5 = arith.constant 0 : index
    %4 = vector.load %arg8[%c17_4, %c0_5] : memref<18x128xf32, #tpu.memory_space<vmem>>, vector<1x128xf32>
    tpu.vector_store %arg8[%c17_4, %c0_5], %0 {strides = array<i32>} : memref<18x128xf32, #tpu.memory_space<vmem>>, vector<1x128xf32>,
    %c0_6 = arith.constant 0 : index
    %c0_7 = arith.constant 0 : index
    %c0_8 = arith.constant 0 : index
    %5 = vector.load %arg1[%c0_6, %c0_7, %c0_8] : memref<1x16x128xf32, #tpu.memory_space<vmem>>, vector<1x16x128xf32>
    %6 = vector.shape_cast %5 : vector<1x16x128xf32> to vector<16x128xf32>
    %c1 = arith.constant 1 : index
    %c0_9 = arith.constant 0 : index
    %7 = vector.load %arg7[%c1, %c0_9] : memref<18x128xf32, #tpu.memory_space<vmem>>, vector<16x128xf32>
    tpu.vector_store %arg7[%c1, %c0_9], %6 {strides = array<i32>} : memref<18x128xf32, #tpu.memory_space<vmem>>, vector<16x128xf32>,
    %c0_10 = arith.constant 0 : index
    %c0_11 = arith.constant 0 : index
    %8 = vector.load %arg7[%c0_10, %c0_11] : memref<18x128xf32, #tpu.memory_space<vmem>>, vector<16x128xf32>
    %c0_12 = arith.constant 0 : index
    %c0_13 = arith.constant 0 : index
    %c0_14 = arith.constant 0 : index
    %9 = vector.load %arg2[%c0_12, %c0_13, %c0_14] : memref<3x128x128xf32, #tpu.memory_space<vmem>>, vector<1x128x128xf32>
    %10 = vector.shape_cast %9 : vector<1x128x128xf32> to vector<128x128xf32>
    %cst_15 = arith.constant dense<0.000000e+00> : vector<16x128xf32>
    %11 = tpu.matmul %8, %10, %cst_15 {dimension_numbers = #tpu.dot_dimension_numbers<[1], [0], [0], [1], [0, 0, 1, 1], [], []>} : vector<16x128xf32>, vector<128x128xf32>, vector<16x128xf32> -> vector<16x128xf32>
    %c1_16 = arith.constant 1 : index
    %c0_17 = arith.constant 0 : index
    %12 = vector.load %arg7[%c1_16, %c0_17] : memref<18x128xf32, #tpu.memory_space<vmem>>, vector<16x128xf32>
    %c1_18 = arith.constant 1 : index
    %c0_19 = arith.constant 0 : index
    %c0_20 = arith.constant 0 : index
    %13 = vector.load %arg2[%c1_18, %c0_19, %c0_20] : memref<3x128x128xf32, #tpu.memory_space<vmem>>, vector<1x128x128xf32>
    %14 = vector.shape_cast %13 : vector<1x128x128xf32> to vector<128x128xf32>
    %cst_21 = arith.constant dense<0.000000e+00> : vector<16x128xf32>
    %15 = tpu.matmul %12, %14, %cst_21 {dimension_numbers = #tpu.dot_dimension_numbers<[1], [0], [0], [1], [0, 0, 1, 1], [], []>} : vector<16x128xf32>, vector<128x128xf32>, vector<16x128xf32> -> vector<16x128xf32>
    %16 = arith.addf %11, %15 : vector<16x128xf32>
    %c2 = arith.constant 2 : index
    %c0_22 = arith.constant 0 : index
    %17 = vector.load %arg7[%c2, %c0_22] : memref<18x128xf32, #tpu.memory_space<vmem>>, vector<16x128xf32>
    %c2_23 = arith.constant 2 : index
    %c0_24 = arith.constant 0 : index
    %c0_25 = arith.constant 0 : index
    %18 = vector.load %arg2[%c2_23, %c0_24, %c0_25] : memref<3x128x128xf32, #tpu.memory_space<vmem>>, vector<1x128x128xf32>
    %19 = vector.shape_cast %18 : vector<1x128x128xf32> to vector<128x128xf32>
    %cst_26 = arith.constant dense<0.000000e+00> : vector<16x128xf32>
    %20 = tpu.matmul %17, %19, %cst_26 {dimension_numbers = #tpu.dot_dimension_numbers<[1], [0], [0], [1], [0, 0, 1, 1], [], []>} : vector<16x128xf32>, vector<128x128xf32>, vector<16x128xf32> -> vector<16x128xf32>
    %21 = arith.addf %16, %20 : vector<16x128xf32>
    %c0_27 = arith.constant 0 : index
    %c0_28 = arith.constant 0 : index
    %22 = vector.load %arg3[%c0_27, %c0_28] : memref<1x128xf32, #tpu.memory_space<vmem>>, vector<1x128xf32>
    %23 = vector.broadcast %22 : vector<1x128xf32> to vector<16x128xf32>
    %24 = arith.addf %21, %23 : vector<16x128xf32>
    %cst_29 = arith.constant 0.000000e+00 : f32
    %25 = vector.broadcast %cst_29 : f32 to vector<16x128xf32>
    %26 = arith.maximumf %24, %25 : vector<16x128xf32>
    %c1_30 = arith.constant 1 : index
    %c0_31 = arith.constant 0 : index
    %27 = vector.load %arg8[%c1_30, %c0_31] : memref<18x128xf32, #tpu.memory_space<vmem>>, vector<16x128xf32>
    tpu.vector_store %arg8[%c1_30, %c0_31], %26 {strides = array<i32>} : memref<18x128xf32, #tpu.memory_space<vmem>>, vector<16x128xf32>,
    %c0_32 = arith.constant 0 : index
    %c0_33 = arith.constant 0 : index
    %28 = vector.load %arg8[%c0_32, %c0_33] : memref<18x128xf32, #tpu.memory_space<vmem>>, vector<16x128xf32>
    %c0_34 = arith.constant 0 : index
    %c0_35 = arith.constant 0 : index
    %c0_36 = arith.constant 0 : index
    %29 = vector.load %arg4[%c0_34, %c0_35, %c0_36] : memref<3x128x128xf32, #tpu.memory_space<vmem>>, vector<1x128x128xf32>
    %30 = vector.shape_cast %29 : vector<1x128x128xf32> to vector<128x128xf32>
    %cst_37 = arith.constant dense<0.000000e+00> : vector<16x128xf32>
    %31 = tpu.matmul %28, %30, %cst_37 {dimension_numbers = #tpu.dot_dimension_numbers<[1], [0], [0], [1], [0, 0, 1, 1], [], []>} : vector<16x128xf32>, vector<128x128xf32>, vector<16x128xf32> -> vector<16x128xf32>
    %c1_38 = arith.constant 1 : index
    %c0_39 = arith.constant 0 : index
    %32 = vector.load %arg8[%c1_38, %c0_39] : memref<18x128xf32, #tpu.memory_space<vmem>>, vector<16x128xf32>
    %c1_40 = arith.constant 1 : index
    %c0_41 = arith.constant 0 : index
    %c0_42 = arith.constant 0 : index
    %33 = vector.load %arg4[%c1_40, %c0_41, %c0_42] : memref<3x128x128xf32, #tpu.memory_space<vmem>>, vector<1x128x128xf32>
    %34 = vector.shape_cast %33 : vector<1x128x128xf32> to vector<128x128xf32>
    %cst_43 = arith.constant dense<0.000000e+00> : vector<16x128xf32>
    %35 = tpu.matmul %32, %34, %cst_43 {dimension_numbers = #tpu.dot_dimension_numbers<[1], [0], [0], [1], [0, 0, 1, 1], [], []>} : vector<16x128xf32>, vector<128x128xf32>, vector<16x128xf32> -> vector<16x128xf32>
    %36 = arith.addf %31, %35 : vector<16x128xf32>
    %c2_44 = arith.constant 2 : index
    %c0_45 = arith.constant 0 : index
    %37 = vector.load %arg8[%c2_44, %c0_45] : memref<18x128xf32, #tpu.memory_space<vmem>>, vector<16x128xf32>
    %c2_46 = arith.constant 2 : index
    %c0_47 = arith.constant 0 : index
    %c0_48 = arith.constant 0 : index
    %38 = vector.load %arg4[%c2_46, %c0_47, %c0_48] : memref<3x128x128xf32, #tpu.memory_space<vmem>>, vector<1x128x128xf32>
    %39 = vector.shape_cast %38 : vector<1x128x128xf32> to vector<128x128xf32>
    %cst_49 = arith.constant dense<0.000000e+00> : vector<16x128xf32>
    %40 = tpu.matmul %37, %39, %cst_49 {dimension_numbers = #tpu.dot_dimension_numbers<[1], [0], [0], [1], [0, 0, 1, 1], [], []>} : vector<16x128xf32>, vector<128x128xf32>, vector<16x128xf32> -> vector<16x128xf32>
    %41 = arith.addf %36, %40 : vector<16x128xf32>
    %c0_50 = arith.constant 0 : index
    %c0_51 = arith.constant 0 : index
    %42 = vector.load %arg5[%c0_50, %c0_51] : memref<1x128xf32, #tpu.memory_space<vmem>>, vector<1x128xf32>
    %43 = vector.broadcast %42 : vector<1x128xf32> to vector<16x128xf32>
    %44 = arith.addf %41, %43 : vector<16x128xf32>
    %c1_52 = arith.constant 1 : index
    %c0_53 = arith.constant 0 : index
    %45 = vector.load %arg7[%c1_52, %c0_53] : memref<18x128xf32, #tpu.memory_space<vmem>>, vector<16x128xf32>
    %46 = arith.addf %44, %45 : vector<16x128xf32>
    %cst_54 = arith.constant 0.000000e+00 : f32
    %47 = vector.broadcast %cst_54 : f32 to vector<16x128xf32>
    %48 = arith.maximumf %46, %47 : vector<16x128xf32>
    %c0_55 = arith.constant 0 : index
    %c0_56 = arith.constant 0 : index
    %c0_57 = arith.constant 0 : index
    %49 = vector.load %arg6[%c0_55, %c0_56, %c0_57] : memref<1x16x128xf32, #tpu.memory_space<vmem>>, vector<1x16x128xf32>
    %50 = vector.shape_cast %49 : vector<1x16x128xf32> to vector<16x128xf32>
    %51 = vector.shape_cast %48 : vector<16x128xf32> to vector<1x16x128xf32>
    tpu.vector_store %arg6[%c0_55, %c0_56, %c0_57], %51 {strides = array<i32>} : memref<1x16x128xf32, #tpu.memory_space<vmem>>, vector<1x16x128xf32>,
    return
  }
  func.func @transform_0(%arg0: i32) -> (i32, i32, i32) {
    %c0_i32 = arith.constant 0 : i32
    %c0_i32_0 = arith.constant 0 : i32
    %c0_i32_1 = arith.constant 0 : i32
    return %arg0, %c0_i32, %c0_i32_0 : i32, i32, i32
  }
  func.func @transform_1(%arg0: i32) -> (i32, i32, i32) {
    %c0_i32 = arith.constant 0 : i32
    %c0_i32_0 = arith.constant 0 : i32
    %c0_i32_1 = arith.constant 0 : i32
    %c0_i32_2 = arith.constant 0 : i32
    return %c0_i32, %c0_i32_0, %c0_i32_1 : i32, i32, i32
  }
  func.func @transform_2(%arg0: i32) -> (i32, i32) {
    %c0_i32 = arith.constant 0 : i32
    %c0_i32_0 = arith.constant 0 : i32
    %c0_i32_1 = arith.constant 0 : i32
    return %c0_i32, %c0_i32_0 : i32, i32
  }
  func.func @transform_3(%arg0: i32) -> (i32, i32, i32) {
    %c0_i32 = arith.constant 0 : i32
    %c0_i32_0 = arith.constant 0 : i32
    %c0_i32_1 = arith.constant 0 : i32
    %c0_i32_2 = arith.constant 0 : i32
    return %c0_i32, %c0_i32_0, %c0_i32_1 : i32, i32, i32
  }
  func.func @transform_4(%arg0: i32) -> (i32, i32) {
    %c0_i32 = arith.constant 0 : i32
    %c0_i32_0 = arith.constant 0 : i32
    %c0_i32_1 = arith.constant 0 : i32
    return %c0_i32, %c0_i32_0 : i32, i32
  }
  func.func @transform_5(%arg0: i32) -> (i32, i32, i32) {
    %c0_i32 = arith.constant 0 : i32
    %c0_i32_0 = arith.constant 0 : i32
    %c0_i32_1 = arith.constant 0 : i32
    return %arg0, %c0_i32, %c0_i32_0 : i32, i32, i32
  }
}

</mosaic_0001>

<llo_original>
// kernel: tpu_custom_call.1
$region0: #{tpu_custom_call.1}
  #allocation0 [shape = 'u32[]', space=smem, size = 0x4, offset = 0x4, fixed_abs, tag = 'smem constant byte address 0x4 - core index']
  #allocation1 [shape = 'u32[72,128]{1,0:T(1,128)}', space=vmem, size = 0x9000, scoped, tag = 'internal scratch']
  #allocation2 [shape = 'f32[18,128]{1,0:T(8,128)}', space=vmem, size = 0x3000, scoped, tag = 'scratch operand']
  #allocation3 [shape = 'f32[18,128]{1,0:T(8,128)}', space=vmem, size = 0x3000, scoped, tag = 'scratch operand']
  %s0 = inlined_call_operand.hbm [shape: f32[8,16,128], index: 0, kind: input, shape index: {}]
  %s1 = inlined_call_operand.hbm [shape: f32[3,128,128], index: 1, kind: input, shape index: {}]
  %s2 = inlined_call_operand.vmem [shape: f32[1,128], index: 2, kind: input, shape index: {}]
  %s3 = inlined_call_operand.hbm [shape: f32[3,128,128], index: 3, kind: input, shape index: {}]
  %s4 = inlined_call_operand.vmem [shape: f32[1,128], index: 4, kind: input, shape index: {}]
  %s5 = inlined_call_operand.hbm [shape: f32[8,16,128], index: 5, kind: output, shape index: {}]
  %s6 = sld [smem:[#allocation0]]
  $region65: #{tpu_custom_call.1} parent=0
    _
  %s8 = ssub.s32 1, %s6
  %s9 = scalar_select 0, %s8, %s6
  $region1: #{tpu_custom_call.1} parent=0
    #allocation4 [shape = 'u8[16384]{0}', space=vmem, size = 0x4000, scoped, tag = 'input window, operand 0']
    #allocation5 [shape = 's32[2]{0}', space=sflag, size = 0x8, scoped, tag = 'scoped memory for tpu_custom_call.1']
    #allocation6 [shape = 's32[2]{0}', space=sflag, size = 0x8, scoped, tag = 'scoped memory for tpu_custom_call.1']
    #allocation7 [shape = 'u8[196608]{0}', space=vmem, size = 0x30000, scoped, tag = 'input window, operand 1, single buffered']
    #allocation8 [shape = 's32[1]{0}', space=sflag, size = 0x4, scoped, tag = 'scoped memory for tpu_custom_call.1']
    #allocation9 [shape = 'u8[196608]{0}', space=vmem, size = 0x30000, scoped, tag = 'input window, operand 3, single buffered']
    #allocation10 [shape = 'u8[16384]{0}', space=vmem, size = 0x4000, scoped, tag = 'output window, operand 0']
    %10 = vsyncpa [#allocation5], 0
    %s11 = scalar_lea.sflag [#allocation5], 1
    %12 = vsyncpa %s11, 0
    %13 = vsyncpa [#allocation8], 0
    %14 = vsyncpa [#allocation6], 0
    %s15 = scalar_lea.sflag [#allocation6], 1
    %16 = vsyncpa %s15, 0
    loop: start=0, step=1, limit=10
    $region2: #{tpu_custom_call.1} parent=1 // loop_pre_header
      _
    $region3: #{tpu_custom_call.1} parent=1 // loop_header
      %s18 = sphi 0, %s22
      %p19 = scmp.ge.s32.totalorder %s18, 10
      %s28 = sphi 0, %s30
      %s31 = sphi 0, %s28
      %s32 = sphi 0, %s31
      %s48 = sphi 0, %s32
      %s52 = sphi 0, %s52
      %s54 = sphi 0, %s52
      %s55 = sphi 0, %s54
      %s69 = sphi 0, %s55
      %s73 = sphi 0, %s73
      %s75 = sphi 0, %s73
      %s76 = sphi 0, %s75
      %s90 = sphi 0, %s76
      %s94 = sphi 0, %s94
      %s96 = sphi 0, %s94
      %s97 = sphi 0, %s96
      %s111 = sphi 0, %s97
      %s115 = sphi 0, %s115
      %s117 = sphi 0, %s115
      %s118 = sphi 0, %s117
      %s132 = sphi 0, %s118
      %s138 = sphi 0, %s140
      %s141 = sphi 0, %s138
      %s142 = sphi 0, %s141
      %s158 = sphi 0, %s142
    $region4: #{tpu_custom_call.1} parent=1 // loop_header_branch
      %21 = sbr.rel (%p19) target = $region8
    $region5: #{tpu_custom_call.1} parent=1 // loop_body
      %s23 = ssub.s32 %s18, 1
      %s24 = ssub.s32 %s18, 2
      %s25 = sadd.s32 %s18, 1
      %s26 = ssub.s32 %s18, %s25
      %p27 = scmp.eq.s32.totalorder %s26, 0
      %s29 = sadd.s32 %s28, 1
      %s30 = scalar_select %p27, %s28, %s29
      %p33 = pneg %p27
      %p34 = scmp.eq.s32.totalorder %s18, 7
      %p35 = por %p33, %p34
      %p36 = scmp.ne.s32.totalorder %s28, %s31
      %p37 = scmp.eq.s32.totalorder %s18, 0
      %p38 = por %p36, %p37
      %p39 = scmp.ne.s32.totalorder %s28, %s31
      %p40 = scmp.eq.s32.totalorder %s23, 7
      %p41 = por %p39, %p40
      %p42 = scmp.ne.s32.totalorder %s31, %s32
      %p43 = scmp.eq.s32.totalorder %s23, 0
      %p44 = por %p42, %p43
      %p45 = scmp.ne.s32.totalorder %s31, %s32
      %p46 = scmp.eq.s32.totalorder %s24, 7
      %p47 = por %p45, %p46
      %p49 = scmp.ne.s32.totalorder %s32, %s48
      %p50 = scmp.eq.s32.totalorder %s24, 0
      %p51 = por %p49, %p50
      %s53 = sadd.s32 %s52, 1
      %p56 = scmp.eq.s32.totalorder %s18, 7
      %p57 = scmp.ne.s32.totalorder %s52, %s54
      %p58 = scmp.eq.s32.totalorder %s18, 0
      %p59 = por %p57, %p58
      %p60 = scmp.ne.s32.totalorder %s52, %s54
      %p61 = scmp.eq.s32.totalorder %s23, 7
      %p62 = por %p60, %p61
      %p63 = scmp.ne.s32.totalorder %s54, %s55
      %p64 = scmp.eq.s32.totalorder %s23, 0
      %p65 = por %p63, %p64
      %p66 = scmp.ne.s32.totalorder %s54, %s55
      %p67 = scmp.eq.s32.totalorder %s24, 7
      %p68 = por %p66, %p67
      %p70 = scmp.ne.s32.totalorder %s55, %s69
      %p71 = scmp.eq.s32.totalorder %s24, 0
      %p72 = por %p70, %p71
      %s74 = sadd.s32 %s73, 1
      %p77 = scmp.eq.s32.totalorder %s18, 7
      %p78 = scmp.ne.s32.totalorder %s73, %s75
      %p79 = scmp.eq.s32.totalorder %s18, 0
      %p80 = por %p78, %p79
      %p81 = scmp.ne.s32.totalorder %s73, %s75
      %p82 = scmp.eq.s32.totalorder %s23, 7
      %p83 = por %p81, %p82
      %p84 = scmp.ne.s32.totalorder %s75, %s76
      %p85 = scmp.eq.s32.totalorder %s23, 0
      %p86 = por %p84, %p85
      %p87 = scmp.ne.s32.totalorder %s75, %s76
      %p88 = scmp.eq.s32.totalorder %s24, 7
      %p89 = por %p87, %p88
      %p91 = scmp.ne.s32.totalorder %s76, %s90
      %p92 = scmp.eq.s32.totalorder %s24, 0
      %p93 = por %p91, %p92
      %s95 = sadd.s32 %s94, 1
      %p98 = scmp.eq.s32.totalorder %s18, 7
      %p99 = scmp.ne.s32.totalorder %s94, %s96
      %p100 = scmp.eq.s32.totalorder %s18, 0
      %p101 = por %p99, %p100
      %p102 = scmp.ne.s32.totalorder %s94, %s96
      %p103 = scmp.eq.s32.totalorder %s23, 7
      %p104 = por %p102, %p103
      %p105 = scmp.ne.s32.totalorder %s96, %s97
      %p106 = scmp.eq.s32.totalorder %s23, 0
      %p107 = por %p105, %p106
      %p108 = scmp.ne.s32.totalorder %s96, %s97
      %p109 = scmp.eq.s32.totalorder %s24, 7
      %p110 = por %p108, %p109
      %p112 = scmp.ne.s32.totalorder %s97, %s111
      %p113 = scmp.eq.s32.totalorder %s24, 0
      %p114 = por %p112, %p113
      %s116 = sadd.s32 %s115, 1
      %p119 = scmp.eq.s32.totalorder %s18, 7
      %p120 = scmp.ne.s32.totalorder %s115, %s117
      %p121 = scmp.eq.s32.totalorder %s18, 0
      %p122 = por %p120, %p121
      %p123 = scmp.ne.s32.totalorder %s115, %s117
      %p124 = scmp.eq.s32.totalorder %s23, 7
      %p125 = por %p123, %p124
      %p126 = scmp.ne.s32.totalorder %s117, %s118
      %p127 = scmp.eq.s32.totalorder %s23, 0
      %p128 = por %p126, %p127
      %p129 = scmp.ne.s32.totalorder %s117, %s118
      %p130 = scmp.eq.s32.totalorder %s24, 7
      %p131 = por %p129, %p130
      %p133 = scmp.ne.s32.totalorder %s118, %s132
      %p134 = scmp.eq.s32.totalorder %s24, 0
      %p135 = por %p133, %p134
      %s136 = ssub.s32 %s18, %s25
      %p137 = scmp.eq.s32.totalorder %s136, 0
      %s139 = sadd.s32 %s138, 1
      %s140 = scalar_select %p137, %s138, %s139
      %p143 = pneg %p137
      %p144 = scmp.eq.s32.totalorder %s18, 7
      %p145 = por %p143, %p144
      %p146 = scmp.ne.s32.totalorder %s138, %s141
      %p147 = scmp.eq.s32.totalorder %s18, 0
      %p148 = por %p146, %p147
      %p149 = scmp.ne.s32.totalorder %s138, %s141
      %p150 = scmp.eq.s32.totalorder %s23, 7
      %p151 = por %p149, %p150
      %p152 = scmp.ne.s32.totalorder %s141, %s142
      %p153 = scmp.eq.s32.totalorder %s23, 0
      %p154 = por %p152, %p153
      %p155 = scmp.ne.s32.totalorder %s141, %s142
      %p156 = scmp.eq.s32.totalorder %s24, 7
      %p157 = por %p155, %p156
      %p159 = scmp.ne.s32.totalorder %s142, %s158
      %p160 = scmp.eq.s32.totalorder %s24, 0
      %p161 = por %p159, %p160
      %p162 = scmp.le.s32.totalorder 1, %s18
      %p163 = scmp.lt.s32.totalorder %s18, 9
      %p164 = pnand %p162, %p163
      %p165 = pneg %p164
      // Predicated region
      $region9: #{tpu_custom_call.1} parent=5 // pred_check
        _
      $region10: #{tpu_custom_call.1} parent=5 // pred_check_branch
        %167 = sbr.rel (%p164) target = $region12
      $region11: #{tpu_custom_call.1} parent=5 // pred_region
        %s168 = ssub.s32 %s18, 1
        // Predicated region
        $region13: #{tpu_custom_call.1} parent=11 // pred_check
          %p169 = pneg %p65
        $region14: #{tpu_custom_call.1} parent=11 // pred_check_branch
          %171 = sbr.rel (%p169) target = $region16
        $region15: #{tpu_custom_call.1} parent=11 // pred_region
          %173 = vsyncadd [#allocation8], 0
          %s174 = sshll.u32 %s1, 4
          %s175 = int_to_ptr.hbm [resolvable:$true] %s174
          %s176 = sshll.u32 [#allocation7], 4
          %s177 = int_to_ptr.vmem [resolvable:$true] %s176
          %182 = dma.hbm_to_vmem [thread:$0]  %s175, 6144, %s177, [#allocation8], 128, 128, 8
        $region16: #{tpu_custom_call.1} parent=11 // pred_fallthru
          _
        // Predicated region
        $region17: #{tpu_custom_call.1} parent=11 // pred_check
          %p183 = pneg %p86
        $region18: #{tpu_custom_call.1} parent=11 // pred_check_branch
          %185 = sbr.rel (%p183) target = $region20
        $region19: #{tpu_custom_call.1} parent=11 // pred_region
          _
        $region20: #{tpu_custom_call.1} parent=11 // pred_fallthru
          _
        // Predicated region
        $region21: #{tpu_custom_call.1} parent=11 // pred_check
          %p186 = pneg %p107
        $region22: #{tpu_custom_call.1} parent=11 // pred_check_branch
          %188 = sbr.rel (%p186) target = $region24
        $region23: #{tpu_custom_call.1} parent=11 // pred_region
          %190 = vsyncadd [#allocation8], 0
          %s191 = sshll.u32 %s3, 4
          %s192 = int_to_ptr.hbm [resolvable:$true] %s191
          %s193 = sshll.u32 [#allocation9], 4
          %s194 = int_to_ptr.vmem [resolvable:$true] %s193
          %199 = dma.hbm_to_vmem [thread:$0]  %s192, 6144, %s194, [#allocation8], 128, 128, 8
        $region24: #{tpu_custom_call.1} parent=11 // pred_fallthru
          _
        // Predicated region
        $region25: #{tpu_custom_call.1} parent=11 // pred_check
          %p200 = pneg %p128
        $region26: #{tpu_custom_call.1} parent=11 // pred_check_branch
          %202 = sbr.rel (%p200) target = $region28
        $region27: #{tpu_custom_call.1} parent=11 // pred_region
          _
        $region28: #{tpu_custom_call.1} parent=11 // pred_fallthru
          _
      $region12: #{tpu_custom_call.1} parent=5 // pred_fallthru
        _
      %p203 = scmp.lt.s32.totalorder %s18, 8
      // Predicated region
      $region29: #{tpu_custom_call.1} parent=5 // pred_check
        %p204 = pneg %p203
      $region30: #{tpu_custom_call.1} parent=5 // pred_check_branch
        %206 = sbr.rel (%p204) target = $region32
      $region31: #{tpu_custom_call.1} parent=5 // pred_region
        // Predicated region
        $region33: #{tpu_custom_call.1} parent=31 // pred_check
          %p207 = pneg %p38
        $region34: #{tpu_custom_call.1} parent=31 // pred_check_branch
          %209 = sbr.rel (%p207) target = $region36
        $region35: #{tpu_custom_call.1} parent=31 // pred_region
          %s210 = sand.u32 %s28, 1
          %s211 = scalar_lea.sflag [#allocation5], %s210
          %s212 = sand.u32 %s28, 1
          %s213 = smul.addr %s212, 16
          %s214 = scalar_lea.vmem [#allocation4], %s213
          %216 = vsyncadd %s211, 0
          %s217 = smul.addr %s18, 2
          %s218 = smul.addr %s217, 8
          %s219 = scalar_lea.hbm %s0, %s218
          %s220 = sshll.u32 %s219, 4
          %s221 = int_to_ptr.hbm [resolvable:$true] %s220
          %s222 = sshll.u32 %s214, 4
          %s223 = int_to_ptr.vmem [resolvable:$true] %s222
          %228 = dma.hbm_to_vmem [thread:$0]  %s221, 256, %s223, %s211, 128, 128, 8
        $region36: #{tpu_custom_call.1} parent=31 // pred_fallthru
          _
      $region32: #{tpu_custom_call.1} parent=5 // pred_fallthru
        _
      %p229 = scmp.le.s32.totalorder 1, %s18
      %p230 = scmp.lt.s32.totalorder %s18, 9
      %p231 = pnand %p229, %p230
      %p232 = pneg %p231
      // Predicated region
      $region37: #{tpu_custom_call.1} parent=5 // pred_check
        _
      $region38: #{tpu_custom_call.1} parent=5 // pred_check_branch
        %234 = sbr.rel (%p231) target = $region40
      $region39: #{tpu_custom_call.1} parent=5 // pred_region
        %s235 = ssub.s32 %s18, 1
        %s236 = sand.u32 %s31, 1
        %s237 = scalar_lea.sflag [#allocation5], %s236
        %s238 = sand.u32 %s31, 1
        %s239 = smul.addr %s238, 16
        %s240 = scalar_lea.vmem [#allocation4], %s239
        // Predicated region
        $region41: #{tpu_custom_call.1} parent=39 // pred_check
          %p241 = pneg %p44
        $region42: #{tpu_custom_call.1} parent=39 // pred_check_branch
          %243 = sbr.rel (%p241) target = $region44
        $region43: #{tpu_custom_call.1} parent=39 // pred_region
          %245 = dma.done %s237, 256
        $region44: #{tpu_custom_call.1} parent=39 // pred_fallthru
          _
        // Predicated region
        $region45: #{tpu_custom_call.1} parent=39 // pred_check
          %p246 = pneg %p65
        $region46: #{tpu_custom_call.1} parent=39 // pred_check_branch
          %248 = sbr.rel (%p246) target = $region48
        $region47: #{tpu_custom_call.1} parent=39 // pred_region
          %250 = dma.done [#allocation8], 6144
        $region48: #{tpu_custom_call.1} parent=39 // pred_fallthru
          _
        // Predicated region
        $region49: #{tpu_custom_call.1} parent=39 // pred_check
          %p251 = pneg %p107
        $region50: #{tpu_custom_call.1} parent=39 // pred_check_branch
          %253 = sbr.rel (%p251) target = $region52
        $region51: #{tpu_custom_call.1} parent=39 // pred_region
          %255 = dma.done [#allocation8], 6144
        $region52: #{tpu_custom_call.1} parent=39 // pred_fallthru
          _
        %s256 = sand.u32 %s31, 1
        %s257 = scalar_lea.sflag [#allocation5], %s256
        %s258 = sand.u32 %s31, 1
        %s259 = smul.addr %s258, 16
        %s260 = scalar_lea.vmem [#allocation4], %s259
        %p261 = pneg %p44
        %p262 = pneg %p41
        %p263 = pneg %p65
        %p264 = pneg %p62
        %p265 = pneg %p86
        %p266 = pneg %p83
        %p267 = pneg %p107
        %p268 = pneg %p104
        %p269 = pneg %p128
        %p270 = pneg %p125
        %p271 = pneg %p154
        %p272 = pneg %p151
        %s273 = sand.u32 %s141, 1
        %s274 = scalar_lea.sflag [#allocation6], %s273
        %s275 = sand.u32 %s141, 1
        %s276 = smul.addr %s275, 16
        %s277 = scalar_lea.vmem [#allocation10], %s276
        %278 = vst [vmem:[#allocation2] sm:$0x1] 0.0
        %279 = vst [vmem:[#allocation2 + $0x11] sm:$0x1] 0.0
        %280 = vst [vmem:[#allocation3] sm:$0x1] 0.0
        %281 = vst [vmem:[#allocation3 + $0x11] sm:$0x1] 0.0
        %v282 = vld [vmem:[%s240] sm:$0xff]
        %v283 = vld [vmem:[%s240 + $0x8] sm:$0xff]
        %284 = vst [vmem:[#allocation2 + $0x1] sm:$0xff] %v282
        %285 = vst [vmem:[#allocation2 + $0x9] sm:$0xff] %v283
        %v286 = vld [vmem:[#allocation2] sm:$0xff]
        %v287 = vld [vmem:[#allocation2 + $0x8] sm:$0xff]
        %v288 = vld [vmem:[#allocation7] sm:$0xff]
        %v289 = vld [vmem:[#allocation7 + $0x8] sm:$0xff]
        %v290 = vld [vmem:[#allocation7 + $0x10] sm:$0xff]
        %v291 = vld [vmem:[#allocation7 + $0x18] sm:$0xff]
        %v292 = vld [vmem:[#allocation7 + $0x20] sm:$0xff]
        %v293 = vld [vmem:[#allocation7 + $0x28] sm:$0xff]
        %v294 = vld [vmem:[#allocation7 + $0x30] sm:$0xff]
        %v295 = vld [vmem:[#allocation7 + $0x38] sm:$0xff]
        %v296 = vld [vmem:[#allocation7 + $0x40] sm:$0xff]
        %v297 = vld [vmem:[#allocation7 + $0x48] sm:$0xff]
        %v298 = vld [vmem:[#allocation7 + $0x50] sm:$0xff]
        %v299 = vld [vmem:[#allocation7 + $0x58] sm:$0xff]
        %v300 = vld [vmem:[#allocation7 + $0x60] sm:$0xff]
        %v301 = vld [vmem:[#allocation7 + $0x68] sm:$0xff]
        %v302 = vld [vmem:[#allocation7 + $0x70] sm:$0xff]
        %v303 = vld [vmem:[#allocation7 + $0x78] sm:$0xff]
        %v304 = vld [vmem:[#allocation2 + $0x1] sm:$0xff]
        %v305 = vld [vmem:[#allocation2 + $0x9] sm:$0xff]
        %s306 = scalar_lea.vmem [#allocation7], 128
        %v307 = vld [vmem:[%s306] sm:$0xff]
        %v308 = vld [vmem:[%s306 + $0x8] sm:$0xff]
        %v309 = vld [vmem:[%s306 + $0x10] sm:$0xff]
        %v310 = vld [vmem:[%s306 + $0x18] sm:$0xff]
        %v311 = vld [vmem:[%s306 + $0x20] sm:$0xff]
        %v312 = vld [vmem:[%s306 + $0x28] sm:$0xff]
        %v313 = vld [vmem:[%s306 + $0x30] sm:$0xff]
        %v314 = vld [vmem:[%s306 + $0x38] sm:$0xff]
        %v315 = vld [vmem:[%s306 + $0x40] sm:$0xff]
        %v316 = vld [vmem:[%s306 + $0x48] sm:$0xff]
        %v317 = vld [vmem:[%s306 + $0x50] sm:$0xff]
        %v318 = vld [vmem:[%s306 + $0x58] sm:$0xff]
        %v319 = vld [vmem:[%s306 + $0x60] sm:$0xff]
        %v320 = vld [vmem:[%s306 + $0x68] sm:$0xff]
        %v321 = vld [vmem:[%s306 + $0x70] sm:$0xff]
        %v322 = vld [vmem:[%s306 + $0x78] sm:$0xff]
        %323 = vmatpush.msra.mxu0 %v322
        %324 = vmatpush.msra.mxu0 %v321
        %325 = vmatpush.msra.mxu0 %v320
        %326 = vmatpush.msra.mxu0 %v319
        %327 = vmatpush.msra.mxu0 %v318
        %328 = vmatpush.msra.mxu0 %v317
        %329 = vmatpush.msra.mxu0 %v316
        %330 = vmatpush.msra.mxu0 %v315
        %331 = vmatpush.msra.mxu0 %v314
        %332 = vmatpush.msra.mxu0 %v313
        %333 = vmatpush.msra.mxu0 %v312
        %334 = vmatpush.msra.mxu0 %v311
        %335 = vmatpush.msra.mxu0 %v310
        %336 = vmatpush.msra.mxu0 %v309
        %337 = vmatpush.msra.mxu0 %v308
        %338 = vmatpush.msra.mxu0 %v307
        %339 = vmatmul.f32.gmra.mxu0 %v304
        %v340 = vpop.f32.mrf.mxu0
        %v341 = vadd.f32 0.0, %v340
        %342 = vmatmul.f32.gmra.mxu0 %v305
        %v343 = vpop.f32.mrf.mxu0
        %v344 = vadd.f32 0.0, %v343
        %345 = vdwg.mxu0
        %346 = vmatpush.msra.mxu0 %v303
        %347 = vmatpush.msra.mxu0 %v302
        %348 = vmatpush.msra.mxu0 %v301
        %349 = vmatpush.msra.mxu0 %v300
        %350 = vmatpush.msra.mxu0 %v299
        %351 = vmatpush.msra.mxu0 %v298
        %352 = vmatpush.msra.mxu0 %v297
        %353 = vmatpush.msra.mxu0 %v296
        %354 = vmatpush.msra.mxu0 %v295
        %355 = vmatpush.msra.mxu0 %v294
        %356 = vmatpush.msra.mxu0 %v293
        %357 = vmatpush.msra.mxu0 %v292
        %358 = vmatpush.msra.mxu0 %v291
        %359 = vmatpush.msra.mxu0 %v290
        %360 = vmatpush.msra.mxu0 %v289
        %361 = vmatpush.msra.mxu0 %v288
        %362 = vmatmul.f32.gmra.mxu0 %v286
        %v363 = vpop.f32.mrf.mxu0
        %v364 = vadd.f32 %v341, %v363
        %365 = vmatmul.f32.gmra.mxu0 %v287
        %v366 = vpop.f32.mrf.mxu0
        %v367 = vadd.f32 %v344, %v366
        %368 = vdwg.mxu0
        %v369 = vld [vmem:[#allocation2 + $0x2] sm:$0xff]
        %v370 = vld [vmem:[#allocation2 + $0xa] sm:$0xff]
        %s371 = scalar_lea.vmem [#allocation7], 256
        %v372 = vld [vmem:[%s371] sm:$0xff]
        %v373 = vld [vmem:[%s371 + $0x8] sm:$0xff]
        %v374 = vld [vmem:[%s371 + $0x10] sm:$0xff]
        %v375 = vld [vmem:[%s371 + $0x18] sm:$0xff]
        %v376 = vld [vmem:[%s371 + $0x20] sm:$0xff]
        %v377 = vld [vmem:[%s371 + $0x28] sm:$0xff]
        %v378 = vld [vmem:[%s371 + $0x30] sm:$0xff]
        %v379 = vld [vmem:[%s371 + $0x38] sm:$0xff]
        %v380 = vld [vmem:[%s371 + $0x40] sm:$0xff]
        %v381 = vld [vmem:[%s371 + $0x48] sm:$0xff]
        %v382 = vld [vmem:[%s371 + $0x50] sm:$0xff]
        %v383 = vld [vmem:[%s371 + $0x58] sm:$0xff]
        %v384 = vld [vmem:[%s371 + $0x60] sm:$0xff]
        %v385 = vld [vmem:[%s371 + $0x68] sm:$0xff]
        %v386 = vld [vmem:[%s371 + $0x70] sm:$0xff]
        %v387 = vld [vmem:[%s371 + $0x78] sm:$0xff]
        %388 = vmatpush.msra.mxu0 %v387
        %389 = vmatpush.msra.mxu0 %v386
        %390 = vmatpush.msra.mxu0 %v385
        %391 = vmatpush.msra.mxu0 %v384
        %392 = vmatpush.msra.mxu0 %v383
        %393 = vmatpush.msra.mxu0 %v382
        %394 = vmatpush.msra.mxu0 %v381
        %395 = vmatpush.msra.mxu0 %v380
        %396 = vmatpush.msra.mxu0 %v379
        %397 = vmatpush.msra.mxu0 %v378
        %398 = vmatpush.msra.mxu0 %v377
        %399 = vmatpush.msra.mxu0 %v376
        %400 = vmatpush.msra.mxu0 %v375
        %401 = vmatpush.msra.mxu0 %v374
        %402 = vmatpush.msra.mxu0 %v373
        %403 = vmatpush.msra.mxu0 %v372
        %404 = vmatmul.f32.gmra.mxu0 %v369
        %v405 = vpop.f32.mrf.mxu0
        %v406 = vadd.f32 0.0, %v405
        %407 = vmatmul.f32.gmra.mxu0 %v370
        %v408 = vpop.f32.mrf.mxu0
        %v409 = vadd.f32 0.0, %v408
        %410 = vdwg.mxu0
        %v411 = vadd.f32 %v364, %v406
        %v412 = vadd.f32 %v367, %v409
        %v413 = vld [vmem:[%s2] sm:$0x1]
        %v415 = vperm.slane %v413, 0
        %v417 = vadd.f32 %v411, %v415
        %v418 = vadd.f32 %v412, %v415
        %v419 = vmax.f32 %v417, 0.0
        %v420 = vmax.f32 %v418, 0.0
        %421 = vst [vmem:[#allocation3 + $0x1] sm:$0xff] %v419
        %422 = vst [vmem:[#allocation3 + $0x9] sm:$0xff] %v420
        %v423 = vld [vmem:[#allocation3] sm:$0xff]
        %v424 = vld [vmem:[#allocation3 + $0x8] sm:$0xff]
        %v425 = vld [vmem:[#allocation9] sm:$0xff]
        %v426 = vld [vmem:[#allocation9 + $0x8] sm:$0xff]
        %v427 = vld [vmem:[#allocation9 + $0x10] sm:$0xff]
        %v428 = vld [vmem:[#allocation9 + $0x18] sm:$0xff]
        %v429 = vld [vmem:[#allocation9 + $0x20] sm:$0xff]
        %v430 = vld [vmem:[#allocation9 + $0x28] sm:$0xff]
        %v431 = vld [vmem:[#allocation9 + $0x30] sm:$0xff]
        %v432 = vld [vmem:[#allocation9 + $0x38] sm:$0xff]
        %v433 = vld [vmem:[#allocation9 + $0x40] sm:$0xff]
        %v434 = vld [vmem:[#allocation9 + $0x48] sm:$0xff]
        %v435 = vld [vmem:[#allocation9 + $0x50] sm:$0xff]
        %v436 = vld [vmem:[#allocation9 + $0x58] sm:$0xff]
        %v437 = vld [vmem:[#allocation9 + $0x60] sm:$0xff]
        %v438 = vld [vmem:[#allocation9 + $0x68] sm:$0xff]
        %v439 = vld [vmem:[#allocation9 + $0x70] sm:$0xff]
        %v440 = vld [vmem:[#allocation9 + $0x78] sm:$0xff]
        %v441 = vld [vmem:[#allocation3 + $0x1] sm:$0xff]
        %v442 = vld [vmem:[#allocation3 + $0x9] sm:$0xff]
        %s443 = scalar_lea.vmem [#allocation9], 128
        %v444 = vld [vmem:[%s443] sm:$0xff]
        %v445 = vld [vmem:[%s443 + $0x8] sm:$0xff]
        %v446 = vld [vmem:[%s443 + $0x10] sm:$0xff]
        %v447 = vld [vmem:[%s443 + $0x18] sm:$0xff]
        %v448 = vld [vmem:[%s443 + $0x20] sm:$0xff]
        %v449 = vld [vmem:[%s443 + $0x28] sm:$0xff]
        %v450 = vld [vmem:[%s443 + $0x30] sm:$0xff]
        %v451 = vld [vmem:[%s443 + $0x38] sm:$0xff]
        %v452 = vld [vmem:[%s443 + $0x40] sm:$0xff]
        %v453 = vld [vmem:[%s443 + $0x48] sm:$0xff]
        %v454 = vld [vmem:[%s443 + $0x50] sm:$0xff]
        %v455 = vld [vmem:[%s443 + $0x58] sm:$0xff]
        %v456 = vld [vmem:[%s443 + $0x60] sm:$0xff]
        %v457 = vld [vmem:[%s443 + $0x68] sm:$0xff]
        %v458 = vld [vmem:[%s443 + $0x70] sm:$0xff]
        %v459 = vld [vmem:[%s443 + $0x78] sm:$0xff]
        %460 = vmatpush.msra.mxu0 %v459
        %461 = vmatpush.msra.mxu0 %v458
        %462 = vmatpush.msra.mxu0 %v457
        %463 = vmatpush.msra.mxu0 %v456
        %464 = vmatpush.msra.mxu0 %v455
        %465 = vmatpush.msra.mxu0 %v454
        %466 = vmatpush.msra.mxu0 %v453
        %467 = vmatpush.msra.mxu0 %v452
        %468 = vmatpush.msra.mxu0 %v451
        %469 = vmatpush.msra.mxu0 %v450
        %470 = vmatpush.msra.mxu0 %v449
        %471 = vmatpush.msra.mxu0 %v448
        %472 = vmatpush.msra.mxu0 %v447
        %473 = vmatpush.msra.mxu0 %v446
        %474 = vmatpush.msra.mxu0 %v445
        %475 = vmatpush.msra.mxu0 %v444
        %476 = vmatmul.f32.gmra.mxu0 %v441
        %v477 = vpop.f32.mrf.mxu0
        %v478 = vadd.f32 0.0, %v477
        %479 = vmatmul.f32.gmra.mxu0 %v442
        %v480 = vpop.f32.mrf.mxu0
        %v481 = vadd.f32 0.0, %v480
        %482 = vdwg.mxu0
        %483 = vmatpush.msra.mxu0 %v440
        %484 = vmatpush.msra.mxu0 %v439
        %485 = vmatpush.msra.mxu0 %v438
        %486 = vmatpush.msra.mxu0 %v437
        %487 = vmatpush.msra.mxu0 %v436
        %488 = vmatpush.msra.mxu0 %v435
        %489 = vmatpush.msra.mxu0 %v434
        %490 = vmatpush.msra.mxu0 %v433
        %491 = vmatpush.msra.mxu0 %v432
        %492 = vmatpush.msra.mxu0 %v431
        %493 = vmatpush.msra.mxu0 %v430
        %494 = vmatpush.msra.mxu0 %v429
        %495 = vmatpush.msra.mxu0 %v428
        %496 = vmatpush.msra.mxu0 %v427
        %497 = vmatpush.msra.mxu0 %v426
        %498 = vmatpush.msra.mxu0 %v425
        %499 = vmatmul.f32.gmra.mxu0 %v423
        %v500 = vpop.f32.mrf.mxu0
        %v501 = vadd.f32 %v478, %v500
        %502 = vmatmul.f32.gmra.mxu0 %v424
        %v503 = vpop.f32.mrf.mxu0
        %v504 = vadd.f32 %v481, %v503
        %505 = vdwg.mxu0
        %v506 = vld [vmem:[#allocation3 + $0x2] sm:$0xff]
        %v507 = vld [vmem:[#allocation3 + $0xa] sm:$0xff]
        %s508 = scalar_lea.vmem [#allocation9], 256
        %v509 = vld [vmem:[%s508] sm:$0xff]
        %v510 = vld [vmem:[%s508 + $0x8] sm:$0xff]
        %v511 = vld [vmem:[%s508 + $0x10] sm:$0xff]
        %v512 = vld [vmem:[%s508 + $0x18] sm:$0xff]
        %v513 = vld [vmem:[%s508 + $0x20] sm:$0xff]
        %v514 = vld [vmem:[%s508 + $0x28] sm:$0xff]
        %v515 = vld [vmem:[%s508 + $0x30] sm:$0xff]
        %v516 = vld [vmem:[%s508 + $0x38] sm:$0xff]
        %v517 = vld [vmem:[%s508 + $0x40] sm:$0xff]
        %v518 = vld [vmem:[%s508 + $0x48] sm:$0xff]
        %v519 = vld [vmem:[%s508 + $0x50] sm:$0xff]
        %v520 = vld [vmem:[%s508 + $0x58] sm:$0xff]
        %v521 = vld [vmem:[%s508 + $0x60] sm:$0xff]
        %v522 = vld [vmem:[%s508 + $0x68] sm:$0xff]
        %v523 = vld [vmem:[%s508 + $0x70] sm:$0xff]
        %v524 = vld [vmem:[%s508 + $0x78] sm:$0xff]
        %525 = vmatpush.msra.mxu0 %v524
        %526 = vmatpush.msra.mxu0 %v523
        %527 = vmatpush.msra.mxu0 %v522
        %528 = vmatpush.msra.mxu0 %v521
        %529 = vmatpush.msra.mxu0 %v520
        %530 = vmatpush.msra.mxu0 %v519
        %531 = vmatpush.msra.mxu0 %v518
        %532 = vmatpush.msra.mxu0 %v517
        %533 = vmatpush.msra.mxu0 %v516
        %534 = vmatpush.msra.mxu0 %v515
        %535 = vmatpush.msra.mxu0 %v514
        %536 = vmatpush.msra.mxu0 %v513
        %537 = vmatpush.msra.mxu0 %v512
        %538 = vmatpush.msra.mxu0 %v511
        %539 = vmatpush.msra.mxu0 %v510
        %540 = vmatpush.msra.mxu0 %v509
        %541 = vmatmul.f32.gmra.mxu0 %v506
        %v542 = vpop.f32.mrf.mxu0
        %v543 = vadd.f32 0.0, %v542
        %544 = vmatmul.f32.gmra.mxu0 %v507
        %v545 = vpop.f32.mrf.mxu0
        %v546 = vadd.f32 0.0, %v545
        %547 = vdwg.mxu0
        %v548 = vadd.f32 %v501, %v543
        %v549 = vadd.f32 %v504, %v546
        %v550 = vld [vmem:[%s4] sm:$0x1]
        %v552 = vperm.slane %v550, 0
        %v554 = vadd.f32 %v548, %v552
        %v555 = vadd.f32 %v549, %v552
        %v556 = vld [vmem:[#allocation2 + $0x1] sm:$0xff]
        %v557 = vld [vmem:[#allocation2 + $0x9] sm:$0xff]
        %v558 = vadd.f32 %v554, %v556
        %v559 = vadd.f32 %v555, %v557
        %v560 = vmax.f32 %v558, 0.0
        %v561 = vmax.f32 %v559, 0.0
        %562 = vst [vmem:[%s277] sm:$0xff] %v560
        %563 = vst [vmem:[%s277 + $0x8] sm:$0xff] %v561
        %s564 = sand.u32 %s141, 1
        %s565 = scalar_lea.sflag [#allocation6], %s564
        %s566 = sand.u32 %s141, 1
        %s567 = smul.addr %s566, 16
        %s568 = scalar_lea.vmem [#allocation10], %s567
        // Predicated region
        $region53: #{tpu_custom_call.1} parent=39 // pred_check
          %p569 = pneg %p151
        $region54: #{tpu_custom_call.1} parent=39 // pred_check_branch
          %571 = sbr.rel (%p569) target = $region56
        $region55: #{tpu_custom_call.1} parent=39 // pred_region
          %573 = vsyncadd %s565, 0
          %s574 = smul.addr %s23, 2
          %s575 = smul.addr %s574, 8
          %s576 = scalar_lea.hbm %s5, %s575
          %s577 = sshll.u32 %s568, 4
          %s578 = int_to_ptr.vmem [resolvable:$true] %s577
          %s579 = sshll.u32 %s576, 4
          %s580 = int_to_ptr.hbm [resolvable:$true] %s579
          %585 = dma.vmem_to_hbm [thread:$0]  %s578, 256, %s580, %s565, 128, 128, 8
        $region56: #{tpu_custom_call.1} parent=39 // pred_fallthru
          _
      $region40: #{tpu_custom_call.1} parent=5 // pred_fallthru
        _
      %p586 = scmp.le.s32.totalorder 2, %s18
      // Predicated region
      $region57: #{tpu_custom_call.1} parent=5 // pred_check
        %p587 = pneg %p586
      $region58: #{tpu_custom_call.1} parent=5 // pred_check_branch
        %589 = sbr.rel (%p587) target = $region60
      $region59: #{tpu_custom_call.1} parent=5 // pred_region
        %s590 = ssub.s32 %s18, 2
        // Predicated region
        $region61: #{tpu_custom_call.1} parent=59 // pred_check
          %p591 = pneg %p157
        $region62: #{tpu_custom_call.1} parent=59 // pred_check_branch
          %593 = sbr.rel (%p591) target = $region64
        $region63: #{tpu_custom_call.1} parent=59 // pred_region
          %s594 = sand.u32 %s142, 1
          %s595 = scalar_lea.sflag [#allocation6], %s594
          %s596 = sand.u32 %s142, 1
          %s597 = smul.addr %s596, 16
          %s598 = scalar_lea.vmem [#allocation10], %s597
          %600 = dma.done %s595, 256
        $region64: #{tpu_custom_call.1} parent=59 // pred_fallthru
          _
      $region60: #{tpu_custom_call.1} parent=5 // pred_fallthru
        _
    $region6: #{tpu_custom_call.1} parent=1 // loop_footer
      %s22 = sadd.s32 1, %s18
    $region7: #{tpu_custom_call.1} parent=1 // loop_footer_branch
      %17 = sbr.rel target = $region3
    $region8: #{tpu_custom_call.1} parent=1 // loop_exit
      _
    %601 = vsyncpa [#allocation5], 1
    %s602 = scalar_lea.sflag [#allocation5], 1
    %603 = vsyncpa %s602, 1
    %604 = vsyncpa [#allocation8], 1
    %605 = vsyncpa [#allocation6], 1
    %s606 = scalar_lea.sflag [#allocation6], 1
    %607 = vsyncpa %s606, 1

</llo_original>
